<compile_context>
chip_gen: v7x
topology: tpu7x:2x2x1
jax: 0.10.0
libtpu: 0.0.40
codegen_flags: <defaults>
</compile_context>

<pallas_src>
import functools

import jax
import jax.numpy as jnp
from jax.experimental import pallas as pl
from jax.experimental.pallas import tpu as pltpu

NEG_SLOPE = 0.2
DIVISOR = 0.70710678118            # PyTorch: out = leaky_relu(x, 0.2) / 0.70710678118
SCALE = 1.0 / DIVISOR              # folded at trace time (~sqrt(2)); ~1 ULP vs divide
LANE = 128
MAX_BLOCK_BYTES = 2 * 1024 * 1024  # ~2 MiB blocks: past the roofline knee, VMEM-safe


def _round_up(n: int, m: int) -> int:
    return ((n + m - 1) // m) * m


@functools.lru_cache(maxsize=1)
def _num_tensorcores() -> int:
    """Best-effort TensorCores-per-chip (v7x: 2, v5e/v6e: 1). Never raises."""
    try:
        info = pltpu.get_tpu_info()
        for name in ("num_cores", "core_count", "tensorcores_per_chip", "num_tensorcores"):
            val = getattr(info, name, None)
            if isinstance(val, int) and val > 0:
                return val
    except Exception:
        pass
    try:
        kind = jax.devices()[0].device_kind.lower()
        if "v7" in kind or "7x" in kind:
            return 2
    except Exception:
        pass
    return 1


def _scaled_leaky_relu_kernel(x_ref, o_ref):
    x = x_ref[...]
    # One vmul + select: positive branch * SCALE, negative branch * (NEG_SLOPE*SCALE).
    scale = jnp.where(
        x >= 0,
        jnp.asarray(SCALE, dtype=x.dtype),
        jnp.asarray(NEG_SLOPE * SCALE, dtype=x.dtype),
    )
    o_ref[...] = (x * scale).astype(o_ref.dtype)


def _launch(x2d: jax.Array, *, tile_rows: int, donate_input: bool) -> jax.Array:
    rows, lane = x2d.shape
    dtype = x2d.dtype
    itemsize = jnp.dtype(dtype).itemsize
    # Sublane packing granule: 8 rows for 32-bit, 16 for bf16, 32 for int8/fp8.
    sublane = max(8, 32 // max(1, itemsize))

    # Block sizing: big enough to amortize the ~0.35us/step overhead, capped so
    # the double-buffered (in + out) footprint stays inside every chip's default
    # scoped VMEM (2 bufs x 2 streams x 2 MiB = 8 MiB, v5e headroom included).
    max_tile_rows = max(sublane, (MAX_BLOCK_BYTES // (LANE * itemsize)) // sublane * sublane)
    tr = min(int(tile_rows), max_tile_rows)
    tr = max(sublane, (tr // sublane) * sublane)

    if tr >= rows:
        # Whole array fits in one block.
        if _num_tensorcores() > 1 and rows > sublane:
            # v7x: split into exactly 2 blocks (round UP -> never 3, balanced-ish).
            tr = _round_up(pl.cdiv(rows, 2), sublane)
        else:
            # Single-TC (v5e/v6e): one grid step; full-dim block is always legal.
            tr = rows

    grid = (pl.cdiv(rows, tr),)
    n_elems = rows * lane

    # NOTE: pipeline_mode=pl.Buffered(3) on the specs is a possible <5% win if a
    # profile shows exposed DMA at grid-step boundaries; default depth 2 kept.
    return pl.pallas_call(
        _scaled_leaky_relu_kernel,
        out_shape=jax.ShapeDtypeStruct((rows, lane), dtype),
        grid_spec=pltpu.PrefetchScalarGridSpec(
            num_scalar_prefetch=0,
            grid=grid,
            in_specs=[pl.BlockSpec((tr, LANE), lambda i: (i, 0))],
            out_specs=pl.BlockSpec((tr, LANE), lambda i: (i, 0)),
        ),
        compiler_params=pltpu.CompilerParams(
            dimension_semantics=("parallel",),
        ),
        cost_estimate=pl.CostEstimate(
            flops=2 * n_elems,
            transcendentals=0,
            bytes_accessed=2 * n_elems * itemsize,
        ),
        input_output_aliases={0: 0} if donate_input else {},
    )(x2d)


def _jnp_fallback(x: jax.Array) -> jax.Array:
    return jnp.where(x >= 0, x * SCALE, x * (NEG_SLOPE * SCALE)).astype(x.dtype)


def scaled_leaky_relu(x: jax.Array, *, tile_rows: int = 4096,
                      donate_input: bool = False) -> jax.Array:
    """leaky_relu(x, 0.2) / 0.70710678118, elementwise, via a Pallas TPU kernel.

    `donate_input=True` aliases the output onto the input buffer
    (`input_output_aliases={0: 0}`); only enable it when the caller also donates
    the argument at the jit boundary, otherwise XLA inserts a defensive copy.
    """
    if not jnp.issubdtype(x.dtype, jnp.floating):
        raise TypeError(f"scaled_leaky_relu expects a floating dtype, got {x.dtype}")

    orig_shape = x.shape
    total = x.size
    if total == 0:
        return x

    rem = total % LANE
    if rem == 0:
        # Fast path (common case): lane-aligned, zero padding / slicing.
        out2d = _launch(x.reshape(-1, LANE), tile_rows=tile_rows,
                        donate_input=donate_input)
        return out2d.reshape(orig_shape)

    if total < LANE:
        # Tiny array: not worth a kernel launch.
        return _jnp_fallback(x)

    # Ragged tail (< 128 elements): run the kernel on the lane-aligned prefix and
    # a tiny jnp epilogue on the tail -- avoids the full-array pad -> kernel ->
    # slice round trip (~3x HBM traffic) of the naive padding path.
    flat = x.reshape(-1)
    n_main = total - rem
    main = _launch(flat[:n_main].reshape(-1, LANE), tile_rows=tile_rows,
                   donate_input=False).reshape(-1)
    tail = _jnp_fallback(flat[n_main:])
    return jnp.concatenate([main, tail]).reshape(orig_shape)


if __name__ == "__main__":
    key = jax.random.PRNGKey(0)

    # NCHW conv-style activation, lane-aligned fast path (2*4*16*16 = 2048 = 16*128).
    x = jax.random.normal(key, (2, 4, 16, 16), dtype=jnp.float32)
    out = jax.block_until_ready(scaled_leaky_relu(x))
    ref = jnp.where(x >= 0, x, x * NEG_SLOPE) / DIVISOR
    assert out.shape == x.shape and out.dtype == x.dtype
    assert jnp.allclose(out, ref, atol=1e-6, rtol=1e-6)

    # Ragged (non-multiple-of-128) path: prefix kernel + tail epilogue.
    x2 = jax.random.normal(jax.random.PRNGKey(1), (5, 100), dtype=jnp.float32)
    out2 = jax.block_until_ready(scaled_leaky_relu(x2))
    ref2 = jnp.where(x2 >= 0, x2, x2 * NEG_SLOPE) / DIVISOR
    assert out2.shape == x2.shape and out2.dtype == x2.dtype
    assert jnp.allclose(out2, ref2, atol=1e-6, rtol=1e-6)

    print("KERNEL_OK")
</pallas_src>

<mosaic_0001>
module attributes {stable_mosaic.version = 11 : i64} {
  func.func @_scaled_leaky_relu_kernel(%arg0: i32, %arg1: memref<16x128xf32, #tpu.memory_space<vmem>>, %arg2: memref<16x128xf32, #tpu.memory_space<vmem>>) attributes {dimension_semantics = [#tpu.dimension_semantics<parallel>], iteration_bounds = array<i64: 1>, scalar_prefetch = 0 : i64, scratch_operands = 0 : i64, tpu.core_type = #tpu.core_type<tc>, window_params = [{transform_indices = @transform_0, window_bounds = array<i64: 16, 128>}, {transform_indices = @transform_1, window_bounds = array<i64: 16, 128>}]} {
    %c0 = arith.constant 0 : index
    %c0_0 = arith.constant 0 : index
    %0 = vector.load %arg1[%c0, %c0_0] : memref<16x128xf32, #tpu.memory_space<vmem>>, vector<16x128xf32>
    %cst = arith.constant 0.000000e+00 : f32
    %1 = vector.broadcast %cst : f32 to vector<16x128xf32>
    %2 = arith.cmpf oge, %0, %1 : vector<16x128xf32>
    %cst_1 = arith.constant 1.41421354 : f32
    %cst_2 = arith.constant 0.282842726 : f32
    %3 = vector.broadcast %cst_1 : f32 to vector<16x128xf32>
    %4 = vector.broadcast %cst_2 : f32 to vector<16x128xf32>
    %5 = arith.select %2, %3, %4 : vector<16x128xi1>, vector<16x128xf32>
    %6 = arith.mulf %0, %5 : vector<16x128xf32>
    %c0_3 = arith.constant 0 : index
    %c0_4 = arith.constant 0 : index
    %7 = vector.load %arg2[%c0_3, %c0_4] : memref<16x128xf32, #tpu.memory_space<vmem>>, vector<16x128xf32>
    tpu.vector_store %arg2[%c0_3, %c0_4], %6 {strides = array<i32>} : memref<16x128xf32, #tpu.memory_space<vmem>>, vector<16x128xf32>,
    return
  }
  func.func @transform_0(%arg0: i32) -> (i32, i32) {
    %c0_i32 = arith.constant 0 : i32
    %c0_i32_0 = arith.constant 0 : i32
    return %arg0, %c0_i32 : i32, i32
  }
  func.func @transform_1(%arg0: i32) -> (i32, i32) {
    %c0_i32 = arith.constant 0 : i32
    %c0_i32_0 = arith.constant 0 : i32
    return %arg0, %c0_i32 : i32, i32
  }
}

</mosaic_0001>

<llo_original>
// kernel: tpu_custom_call.1
$region0: #{tpu_custom_call.1}
  #allocation0 [shape = 'u32[]', space=smem, size = 0x4, offset = 0x4, fixed_abs, tag = 'smem constant byte address 0x4 - core index']
  #allocation1 [shape = 'u32[144,128]{1,0:T(1,128)}', space=vmem, size = 0x12000, scoped, tag = 'internal scratch']
  %s0 = inlined_call_operand.hbm [shape: f32[16,128], index: 0, kind: input, shape index: {}]
  %s1 = inlined_call_operand.hbm [shape: f32[16,128], index: 1, kind: output, shape index: {}]
  %s2 = sld [smem:[#allocation0]]
  $region18: #{tpu_custom_call.1} parent=0
    _
  %s4 = ssub.s32 1, %s2
  %s5 = scalar_select 0, %s4, %s2
  $region1: #{tpu_custom_call.1} parent=0
    #allocation2 [shape = 'u8[8192]{0}', space=vmem, size = 0x2000, scoped, tag = 'input window, operand 0, single buffered']
    #allocation3 [shape = 's32[1]{0}', space=sflag, size = 0x4, scoped, tag = 'scoped memory for tpu_custom_call.1']
    #allocation4 [shape = 's32[1]{0}', space=sflag, size = 0x4, scoped, tag = 'scoped memory for tpu_custom_call.1']
    #allocation5 [shape = 'u8[8192]{0}', space=vmem, size = 0x2000, scoped, tag = 'output window, operand 0, single buffered']
    %6 = vsyncpa [#allocation3], 0
    %7 = vsyncpa [#allocation4], 0
    // Predicated region
    $region2: #{tpu_custom_call.1} parent=1 // pred_check
      _
    $region3: #{tpu_custom_call.1} parent=1 // pred_check_branch
      %9 = sbr.rel (0) target = $region5
    $region4: #{tpu_custom_call.1} parent=1 // pred_region
      %s11 = ssub.s32 256, 256
      %12 = vsyncadd [#allocation3], %s11
      %s13 = sshll.u32 [#allocation2], 4
      %s14 = int_to_ptr.vmem [resolvable:$true] %s13
      %19 = dma.hbm_to_vmem [thread:$0]  %s0, 256, %s14, [#allocation3], 128, 128, 8
    $region5: #{tpu_custom_call.1} parent=1 // pred_fallthru
      _
    // Predicated region
    $region6: #{tpu_custom_call.1} parent=1 // pred_check
      _
    $region7: #{tpu_custom_call.1} parent=1 // pred_check_branch
      %21 = sbr.rel (0) target = $region9
    $region8: #{tpu_custom_call.1} parent=1 // pred_region
      %22 = dma.done [#allocation3], 256
    $region9: #{tpu_custom_call.1} parent=1 // pred_fallthru
      _
    %v23 = vld [vmem:[#allocation2] sm:$0xff]
    %v24 = vld [vmem:[#allocation2 + $0x8] sm:$0xff]
    %vm25 = vcmp.ge.f32.partialorder %v23, 0.0
    %vm26 = vcmp.ge.f32.partialorder %v24, 0.0
    %v27 = vsel %vm25, 1.4142135, 0.28284273
    %v28 = vsel %vm26, 1.4142135, 0.28284273
    %v29 = vmul.f32 %v23, %v27
    %v30 = vmul.f32 %v24, %v28
    %31 = vst [vmem:[#allocation5] sm:$0xff] %v29
    %32 = vst [vmem:[#allocation5 + $0x8] sm:$0xff] %v30
    // Predicated region
    $region10: #{tpu_custom_call.1} parent=1 // pred_check
      _
    $region11: #{tpu_custom_call.1} parent=1 // pred_check_branch
      %34 = sbr.rel (0) target = $region13
    $region12: #{tpu_custom_call.1} parent=1 // pred_region
      %s36 = ssub.s32 256, 256
      %37 = vsyncadd [#allocation4], %s36
      %s38 = sshll.u32 [#allocation5], 4
      %s39 = int_to_ptr.vmem [resolvable:$true] %s38
      %44 = dma.vmem_to_hbm [thread:$0]  %s39, 256, %s1, [#allocation4], 128, 128, 8
    $region13: #{tpu_custom_call.1} parent=1 // pred_fallthru
      _
    // Predicated region
    $region14: #{tpu_custom_call.1} parent=1 // pred_check
      _
    $region15: #{tpu_custom_call.1} parent=1 // pred_check_branch
      %46 = sbr.rel (0) target = $region17
    $region16: #{tpu_custom_call.1} parent=1 // pred_region
      %47 = dma.done [#allocation4], 256
    $region17: #{tpu_custom_call.1} parent=1 // pred_fallthru
      _
    %48 = vsyncpa [#allocation3], 1
    %49 = vsyncpa [#allocation4], 1

</llo_original>
